<compile_context>
chip_gen: v6e
topology: v6e:2x2x1
jax: 0.10.0
libtpu: 0.0.40
codegen_flags: <defaults>
</compile_context>

<pallas_src>
import jax
import jax.numpy as jnp
from jax.experimental import pallas as pl
from jax.experimental.pallas import tpu as pltpu


def _reg_weighted_l1_kernel(ind_ref,     # VMEM (1, 1, K)   int32
                            mask_ref,    # VMEM (1, K, C)   f32
                            target_ref,  # VMEM (1, K, C)   f32
                            feat_ref,    # VMEM (1, C, THW) f32  (HW tile of feature map)
                            out_ref,     # SMEM (1,)        f32  final scalar loss
                            pred_acc,    # VMEM (C, K)      f32  gathered-feature accumulator
                            sums):       # SMEM (2,)        f32  [loss_sum, mask_sum]
    b = pl.program_id(0)
    h = pl.program_id(1)
    nb = pl.num_programs(0)
    nh = pl.num_programs(1)

    @pl.when((b == 0) & (h == 0))
    def _():
        sums[0] = jnp.float32(0.0)
        sums[1] = jnp.float32(0.0)

    @pl.when(h == 0)
    def _():
        pred_acc[...] = jnp.zeros_like(pred_acc)

    feat = feat_ref[0]                           # (C, THW)
    idx = ind_ref[0, 0, :]                       # (K,) int32
    thw = feat.shape[1]
    k = idx.shape[0]

    # One-hot gather on the MXU: pred[c, j] += sum_hw feat[c, hw] * (hw == ind[j]).
    hw_pos = jax.lax.broadcasted_iota(jnp.int32, (thw, k), 0) + h * thw
    onehot = (hw_pos == idx[None, :]).astype(jnp.float32)          # (THW, K)
    pred_acc[...] += jnp.dot(feat, onehot, preferred_element_type=jnp.float32)

    last_h = h == nh - 1

    @pl.when(last_h)
    def _():
        pred_kc = pred_acc[...].T                # (K, C) — tiny in-kernel XLU transpose
        m = mask_ref[0]                          # (K, C), native layout (no wrapper transpose)
        t = target_ref[0]                        # (K, C)
        sums[0] += jnp.sum(jnp.abs(pred_kc * m - t * m))   # exact PyTorch form
        sums[1] += jnp.sum(m)

    @pl.when(last_h & (b == nb - 1))
    def _():
        out_ref[0] = sums[0] / (sums[1] + jnp.float32(1e-4))


def _pick_hw_tile(hw, cap=2048):
    """Largest multiple of 128 that divides hw (capped); falls back to full hw."""
    if hw % 128 != 0:
        return hw
    t = min(cap, hw)
    t -= t % 128
    while hw % t != 0:
        t -= 128
    return t


@jax.jit
def reg_weighted_l1_loss(output, mask, ind, target):
    """output: (B,C,H,W), mask: (B,K,C), ind: (B,K) int, target: (B,K,C)."""
    B, C, H, W = output.shape
    K = ind.shape[1]
    HW = H * W

    feat = output.reshape(B, C, HW).astype(jnp.float32)   # free reshape, no HBM transpose
    ind3 = ind.astype(jnp.int32).reshape(B, 1, K)          # free reshape
    mask_f = mask.astype(jnp.float32)                      # native (B,K,C) layout
    target_f = target.astype(jnp.float32)

    thw = _pick_hw_tile(HW)
    nhw = HW // thw

    out = pl.pallas_call(
        _reg_weighted_l1_kernel,
        out_shape=jax.ShapeDtypeStruct((1,), jnp.float32),
        grid_spec=pltpu.PrefetchScalarGridSpec(
            num_scalar_prefetch=0,
            grid=(B, nhw),                                  # HW (reduction) axis last
            in_specs=[
                pl.BlockSpec((1, 1, K), lambda b, h: (b, 0, 0)),
                pl.BlockSpec((1, K, C), lambda b, h: (b, 0, 0)),
                pl.BlockSpec((1, K, C), lambda b, h: (b, 0, 0)),
                pl.BlockSpec((1, C, thw), lambda b, h: (b, 0, h)),
            ],
            out_specs=pl.BlockSpec(memory_space=pltpu.MemorySpace.SMEM),
            scratch_shapes=[
                pltpu.VMEM((C, K), jnp.float32),
                pltpu.SMEM((2,), jnp.float32),
            ],
        ),
        # Both grid axes carry the running scalar sums -> must stay sequential.
        # TODO(synk): v7x megacore split (per-core partial sums + tiny combine pass).
        compiler_params=pltpu.CompilerParams(
            dimension_semantics=("arbitrary", "arbitrary")),
    )(ind3, mask_f, target_f, feat)

    return out[0]


def _reference_loss(output, mask, ind, target):
    B, C, H, W = output.shape
    feat = jnp.transpose(output, (0, 2, 3, 1)).reshape(B, H * W, C)
    pred = jax.vmap(lambda f, i: f[i])(feat, ind)            # (B, K, C)
    loss = jnp.sum(jnp.abs(pred * mask - target * mask))
    return loss / (jnp.sum(mask) + 1e-4)


if __name__ == "__main__":
    def _make_inputs(key, B, C, H, W, K):
        k1, k2, k3, k4 = jax.random.split(key, 4)
        output = jax.random.normal(k1, (B, C, H, W), dtype=jnp.float32)
        target = jax.random.normal(k2, (B, K, C), dtype=jnp.float32)
        ind = jax.random.randint(k3, (B, K), 0, H * W, dtype=jnp.int32)
        mask = (jax.random.uniform(k4, (B, K, C)) > 0.3).astype(jnp.float32)
        return output, mask, ind, target

    key = jax.random.PRNGKey(0)
    # Small CenterNet-like shapes; the second config forces nhw > 1 so the
    # multi-step in-kernel HW-tile accumulation path is exercised too.
    for (B, C, H, W, K) in [(2, 4, 16, 16, 8), (2, 4, 64, 64, 8)]:
        key, sub = jax.random.split(key)
        output, mask, ind, target = _make_inputs(sub, B, C, H, W, K)
        loss = jax.block_until_ready(reg_weighted_l1_loss(output, mask, ind, target))
        ref = jax.block_until_ready(_reference_loss(output, mask, ind, target))
        assert jnp.allclose(loss, ref, rtol=1e-5, atol=1e-5), (B, C, H, W, K, loss, ref)

    print("KERNEL_OK")
</pallas_src>

<mosaic_0001>
module attributes {stable_mosaic.version = 11 : i64} {
  func.func @_reg_weighted_l1_kernel(%arg0: i32, %arg1: i32, %arg2: memref<1x1x8xi32, #tpu.memory_space<vmem>>, %arg3: memref<1x8x4xf32, #tpu.memory_space<vmem>>, %arg4: memref<1x8x4xf32, #tpu.memory_space<vmem>>, %arg5: memref<1x4x256xf32, #tpu.memory_space<vmem>>, %arg6: memref<1xf32, #tpu.memory_space<smem>>, %arg7: memref<4x8xf32, #tpu.memory_space<vmem>>, %arg8: memref<2xf32, #tpu.memory_space<smem>>) attributes {dimension_semantics = [#tpu.dimension_semantics<arbitrary>, #tpu.dimension_semantics<arbitrary>], iteration_bounds = array<i64: 2, 1>, scalar_prefetch = 0 : i64, scratch_operands = 2 : i64, tpu.core_type = #tpu.core_type<tc>, window_params = [{transform_indices = @transform_0, window_bounds = array<i64: 1, 1, 8>}, {transform_indices = @transform_1, window_bounds = array<i64: 1, 8, 4>}, {transform_indices = @transform_2, window_bounds = array<i64: 1, 8, 4>}, {transform_indices = @transform_3, window_bounds = array<i64: 1, 4, 256>}, {transform_indices = @transform_4, window_bounds = array<i64: 1>}]} {
    %c0_i32 = arith.constant 0 : i32
    %0 = arith.cmpi eq, %arg0, %c0_i32 : i32
    %c0_i32_0 = arith.constant 0 : i32
    %1 = arith.cmpi eq, %arg1, %c0_i32_0 : i32
    %2 = arith.andi %0, %1 : i1
    %3 = arith.extui %2 : i1 to i32
    %c0_i32_1 = arith.constant 0 : i32
    %4 = arith.cmpi ne, %3, %c0_i32_1 : i32
    scf.if %4 {
      %cst_16 = arith.constant 0.000000e+00 : f32
      %c0_17 = arith.constant 0 : index
      %32 = memref.load %arg8[%c0_17] : memref<2xf32, #tpu.memory_space<smem>>
      memref.store %cst_16, %arg8[%c0_17] : memref<2xf32, #tpu.memory_space<smem>>
      %cst_18 = arith.constant 0.000000e+00 : f32
      %c1 = arith.constant 1 : index
      %33 = memref.load %arg8[%c1] : memref<2xf32, #tpu.memory_space<smem>>
      memref.store %cst_18, %arg8[%c1] : memref<2xf32, #tpu.memory_space<smem>>
    } else {
    }
    %c0_i32_2 = arith.constant 0 : i32
    %5 = arith.cmpi eq, %arg1, %c0_i32_2 : i32
    %6 = arith.extui %5 : i1 to i32
    %c0_i32_3 = arith.constant 0 : i32
    %7 = arith.cmpi ne, %6, %c0_i32_3 : i32
    scf.if %7 {
      %cst_16 = arith.constant 0.000000e+00 : f32
      %32 = vector.broadcast %cst_16 : f32 to vector<4x8xf32>
      %c0_17 = arith.constant 0 : index
      %c0_18 = arith.constant 0 : index
      %33 = vector.load %arg7[%c0_17, %c0_18] : memref<4x8xf32, #tpu.memory_space<vmem>>, vector<4x8xf32>
      tpu.vector_store %arg7[%c0_17, %c0_18], %32 {strides = array<i32>} : memref<4x8xf32, #tpu.memory_space<vmem>>, vector<4x8xf32>,
    } else {
    }
    %c0 = arith.constant 0 : index
    %c0_4 = arith.constant 0 : index
    %c0_5 = arith.constant 0 : index
    %8 = vector.load %arg5[%c0, %c0_4, %c0_5] : memref<1x4x256xf32, #tpu.memory_space<vmem>>, vector<1x4x256xf32>
    %9 = vector.shape_cast %8 : vector<1x4x256xf32> to vector<4x256xf32>
    %c0_6 = arith.constant 0 : index
    %c0_7 = arith.constant 0 : index
    %c0_8 = arith.constant 0 : index
    %10 = vector.load %arg2[%c0_6, %c0_7, %c0_8] : memref<1x1x8xi32, #tpu.memory_space<vmem>>, vector<1x1x8xi32>
    %11 = vector.shape_cast %10 : vector<1x1x8xi32> to vector<8xi32>
    %12 = tpu.iota {dimensions = array<i32: 0>} : vector<256x8xi32>
    %c256_i32 = arith.constant 256 : i32
    %13 = arith.muli %arg1, %c256_i32 : i32
    %14 = vector.broadcast %13 : i32 to vector<256x8xi32>
    %15 = arith.addi %12, %14 : vector<256x8xi32>
    %16 = vector.shape_cast %11 : vector<8xi32> to vector<1x8xi32>
    %17 = vector.broadcast %16 : vector<1x8xi32> to vector<256x8xi32>
    %18 = arith.cmpi eq, %15, %17 : vector<256x8xi32>
    %19 = arith.extui %18 : vector<256x8xi1> to vector<256x8xi32>
    %20 = arith.sitofp %19 : vector<256x8xi32> to vector<256x8xf32>
    %c0_9 = arith.constant 0 : index
    %c0_10 = arith.constant 0 : index
    %21 = vector.load %arg7[%c0_9, %c0_10] : memref<4x8xf32, #tpu.memory_space<vmem>>, vector<4x8xf32>
    %cst = arith.constant dense<0.000000e+00> : vector<4x8xf32>
    %22 = tpu.matmul %9, %20, %cst {dimension_numbers = #tpu.dot_dimension_numbers<[1], [0], [0], [1], [0, 0, 1, 1], [], []>} : vector<4x256xf32>, vector<256x8xf32>, vector<4x8xf32> -> vector<4x8xf32>
    %23 = arith.addf %21, %22 : vector<4x8xf32>
    %c0_11 = arith.constant 0 : index
    %c0_12 = arith.constant 0 : index
    %24 = vector.load %arg7[%c0_11, %c0_12] : memref<4x8xf32, #tpu.memory_space<vmem>>, vector<4x8xf32>
    tpu.vector_store %arg7[%c0_11, %c0_12], %23 {strides = array<i32>} : memref<4x8xf32, #tpu.memory_space<vmem>>, vector<4x8xf32>,
    %c0_i32_13 = arith.constant 0 : i32
    %25 = arith.cmpi eq, %arg1, %c0_i32_13 : i32
    %26 = arith.extui %25 : i1 to i32
    %c0_i32_14 = arith.constant 0 : i32
    %27 = arith.cmpi ne, %26, %c0_i32_14 : i32
    scf.if %27 {
      %c0_16 = arith.constant 0 : index
      %c0_17 = arith.constant 0 : index
      %32 = vector.load %arg7[%c0_16, %c0_17] : memref<4x8xf32, #tpu.memory_space<vmem>>, vector<4x8xf32>
      %33 = tpu.transpose %32, [1, 0] : vector<4x8xf32> -> vector<8x4xf32>
      %c0_18 = arith.constant 0 : index
      %c0_19 = arith.constant 0 : index
      %c0_20 = arith.constant 0 : index
      %34 = vector.load %arg3[%c0_18, %c0_19, %c0_20] : memref<1x8x4xf32, #tpu.memory_space<vmem>>, vector<1x8x4xf32>
      %35 = vector.shape_cast %34 : vector<1x8x4xf32> to vector<8x4xf32>
      %c0_21 = arith.constant 0 : index
      %c0_22 = arith.constant 0 : index
      %c0_23 = arith.constant 0 : index
      %36 = vector.load %arg4[%c0_21, %c0_22, %c0_23] : memref<1x8x4xf32, #tpu.memory_space<vmem>>, vector<1x8x4xf32>
      %37 = vector.shape_cast %36 : vector<1x8x4xf32> to vector<8x4xf32>
      %c0_24 = arith.constant 0 : index
      %38 = memref.load %arg8[%c0_24] : memref<2xf32, #tpu.memory_space<smem>>
      %39 = arith.mulf %33, %35 : vector<8x4xf32>
      %40 = arith.mulf %37, %35 : vector<8x4xf32>
      %41 = arith.subf %39, %40 : vector<8x4xf32>
      %42 = math.absf %41 : vector<8x4xf32>
      %43 = vector.shape_cast %42 : vector<8x4xf32> to vector<1x8x4xf32>
      %cst_25 = arith.constant dense<0.000000e+00> : vector<1xf32>
      %44 = vector.multi_reduction <add>, %43, %cst_25 [1, 2] : vector<1x8x4xf32> to vector<1xf32>
      %45 = vector.shape_cast %44 : vector<1xf32> to vector<1x1x1xf32>
      %46 = vector.extract %45[0, 0, 0] : f32 from vector<1x1x1xf32>
      %47 = arith.addf %38, %46 : f32
      %c0_26 = arith.constant 0 : index
      %48 = memref.load %arg8[%c0_26] : memref<2xf32, #tpu.memory_space<smem>>
      memref.store %47, %arg8[%c0_26] : memref<2xf32, #tpu.memory_space<smem>>
      %c1 = arith.constant 1 : index
      %49 = memref.load %arg8[%c1] : memref<2xf32, #tpu.memory_space<smem>>
      %50 = vector.shape_cast %35 : vector<8x4xf32> to vector<1x8x4xf32>
      %cst_27 = arith.constant dense<0.000000e+00> : vector<1xf32>
      %51 = vector.multi_reduction <add>, %50, %cst_27 [1, 2] : vector<1x8x4xf32> to vector<1xf32>
      %52 = vector.shape_cast %51 : vector<1xf32> to vector<1x1x1xf32>
      %53 = vector.extract %52[0, 0, 0] : f32 from vector<1x1x1xf32>
      %54 = arith.addf %49, %53 : f32
      %c1_28 = arith.constant 1 : index
      %55 = memref.load %arg8[%c1_28] : memref<2xf32, #tpu.memory_space<smem>>
      memref.store %54, %arg8[%c1_28] : memref<2xf32, #tpu.memory_space<smem>>
    } else {
    }
    %c1_i32 = arith.constant 1 : i32
    %28 = arith.cmpi eq, %arg0, %c1_i32 : i32
    %29 = arith.andi %25, %28 : i1
    %30 = arith.extui %29 : i1 to i32
    %c0_i32_15 = arith.constant 0 : i32
    %31 = arith.cmpi ne, %30, %c0_i32_15 : i32
    scf.if %31 {
      %c0_16 = arith.constant 0 : index
      %32 = memref.load %arg8[%c0_16] : memref<2xf32, #tpu.memory_space<smem>>
      %c1 = arith.constant 1 : index
      %33 = memref.load %arg8[%c1] : memref<2xf32, #tpu.memory_space<smem>>
      %cst_17 = arith.constant 9.99999974E-5 : f32
      %34 = arith.addf %33, %cst_17 : f32
      %35 = arith.divf %32, %34 : f32
      %c0_18 = arith.constant 0 : index
      %36 = memref.load %arg6[%c0_18] : memref<1xf32, #tpu.memory_space<smem>>
      memref.store %35, %arg6[%c0_18] : memref<1xf32, #tpu.memory_space<smem>>
    } else {
    }
    return
  }
  func.func @transform_0(%arg0: i32, %arg1: i32) -> (i32, i32, i32) {
    %c0_i32 = arith.constant 0 : i32
    %c0_i32_0 = arith.constant 0 : i32
    %c0_i32_1 = arith.constant 0 : i32
    return %arg0, %c0_i32, %c0_i32_0 : i32, i32, i32
  }
  func.func @transform_1(%arg0: i32, %arg1: i32) -> (i32, i32, i32) {
    %c0_i32 = arith.constant 0 : i32
    %c0_i32_0 = arith.constant 0 : i32
    %c0_i32_1 = arith.constant 0 : i32
    return %arg0, %c0_i32, %c0_i32_0 : i32, i32, i32
  }
  func.func @transform_2(%arg0: i32, %arg1: i32) -> (i32, i32, i32) {
    %c0_i32 = arith.constant 0 : i32
    %c0_i32_0 = arith.constant 0 : i32
    %c0_i32_1 = arith.constant 0 : i32
    return %arg0, %c0_i32, %c0_i32_0 : i32, i32, i32
  }
  func.func @transform_3(%arg0: i32, %arg1: i32) -> (i32, i32, i32) {
    %c0_i32 = arith.constant 0 : i32
    %c0_i32_0 = arith.constant 0 : i32
    return %arg0, %c0_i32, %arg1 : i32, i32, i32
  }
  func.func @transform_4(%arg0: i32, %arg1: i32) -> i32 {
    %c0_i32 = arith.constant 0 : i32
    %c0_i32_0 = arith.constant 0 : i32
    return %c0_i32 : i32
  }
}

</mosaic_0001>

<llo_original>
// kernel: reg_weighted_l1_loss.1
$region0: #{reg_weighted_l1_loss.1}
  #allocation0 [shape = 'u32[]', space=smem, size = 0x4, offset = 0x4, fixed_abs, tag = 'smem constant byte address 0x4 - core index']
  #allocation1 [shape = 'u32[144,128]{1,0:T(1,128)}', space=vmem, size = 0x12000, scoped, tag = 'internal scratch']
  #allocation2 [shape = 'f32[4,8]{1,0:T(4,128)}', space=vmem, size = 0x800, scoped, tag = 'scratch operand']
  #allocation3 [shape = 'f32[2]{0:T(128)}', space=smem, size = 0x200, scoped, tag = 'scratch operand']
  %s0 = inlined_call_operand.vmem [shape: s32[2,1,8], index: 0, kind: input, shape index: {}]
  %s1 = inlined_call_operand.vmem [shape: f32[2,8,4], index: 1, kind: input, shape index: {}]
  %s2 = inlined_call_operand.vmem [shape: f32[2,8,4], index: 2, kind: input, shape index: {}]
  %s3 = inlined_call_operand.vmem [shape: f32[2,4,256], index: 3, kind: input, shape index: {}]
  %s4 = inlined_call_operand.hbm [shape: f32[1], index: 4, kind: output, shape index: {}]
  %s5 = sld [smem:[#allocation0]]
  $region65: #{reg_weighted_l1_loss.1} parent=0
    _
  %s7 = ssub.s32 1, %s5
  %s8 = scalar_select 0, %s7, %s5
  $region1: #{reg_weighted_l1_loss.1} parent=0
    #allocation4 [shape = 'u8[512]{0}', space=smem, size = 0x200, scoped, tag = 'output window, operand 0, single buffered']
    #allocation5 [shape = 's32[2]{0}', space=sflag, size = 0x8, scoped, tag = 'scoped memory for reg_weighted_l1_loss.1']
    %9 = vsyncpa [#allocation5], 0
    loop: start=0, step=1, limit=4
    $region2: #{reg_weighted_l1_loss.1} parent=1 // loop_pre_header
      _
    $region3: #{reg_weighted_l1_loss.1} parent=1 // loop_header
      %s11 = sphi 0, %s15
      %p12 = scmp.ge.s32.totalorder %s11, 4
      %s18 = sphi 0, %s30
      %s19 = sphi 0, %s26
      %s20 = sphi 0, %s18
      %s21 = sphi 0, %s19
      %s22 = sphi 0, %s20
      %s23 = sphi 0, %s21
      %s33 = sphi 0, %s35
      %s36 = sphi 0, %s33
      %s37 = sphi 0, %s36
      %s53 = sphi 0, %s37
      %s59 = sphi 0, %s61
      %s62 = sphi 0, %s59
      %s63 = sphi 0, %s62
      %s79 = sphi 0, %s63
      %s85 = sphi 0, %s87
      %s88 = sphi 0, %s85
      %s89 = sphi 0, %s88
      %s105 = sphi 0, %s89
      %s113 = sphi 0, %s115
      %s116 = sphi 0, %s113
      %s117 = sphi 0, %s116
      %s133 = sphi 0, %s117
      %s137 = sphi 0, %s137
      %s139 = sphi 0, %s137
      %s140 = sphi 0, %s139
      %s154 = sphi 0, %s140
    $region4: #{reg_weighted_l1_loss.1} parent=1 // loop_header_branch
      %14 = sbr.rel (%p12) target = $region8
    $region5: #{reg_weighted_l1_loss.1} parent=1 // loop_body
      %s16 = ssub.s32 %s11, 1
      %s17 = ssub.s32 %s11, 2
      %s24 = sadd.s32 1, %s19
      %p25 = scmp.ge.s32.totalorder %s24, 1
      %s26 = scalar_select %p25, 0, %s24
      %s27 = sadd.s32 1, %s18
      %s28 = scalar_select %p25, %s27, %s18
      %p29 = scmp.ge.s32.totalorder %s28, 2
      %s30 = scalar_select %p29, 0, %s28
      %s31 = ssub.s32 %s18, %s30
      %p32 = scmp.eq.s32.totalorder %s31, 0
      %s34 = sadd.s32 %s33, 1
      %s35 = scalar_select %p32, %s33, %s34
      %p38 = pneg %p32
      %p39 = scmp.eq.s32.totalorder %s11, 1
      %p40 = por %p38, %p39
      %p41 = scmp.ne.s32.totalorder %s33, %s36
      %p42 = scmp.eq.s32.totalorder %s11, 0
      %p43 = por %p41, %p42
      %p44 = scmp.ne.s32.totalorder %s33, %s36
      %p45 = scmp.eq.s32.totalorder %s16, 1
      %p46 = por %p44, %p45
      %p47 = scmp.ne.s32.totalorder %s36, %s37
      %p48 = scmp.eq.s32.totalorder %s16, 0
      %p49 = por %p47, %p48
      %p50 = scmp.ne.s32.totalorder %s36, %s37
      %p51 = scmp.eq.s32.totalorder %s17, 1
      %p52 = por %p50, %p51
      %p54 = scmp.ne.s32.totalorder %s37, %s53
      %p55 = scmp.eq.s32.totalorder %s17, 0
      %p56 = por %p54, %p55
      %s57 = ssub.s32 %s18, %s30
      %p58 = scmp.eq.s32.totalorder %s57, 0
      %s60 = sadd.s32 %s59, 1
      %s61 = scalar_select %p58, %s59, %s60
      %p64 = pneg %p58
      %p65 = scmp.eq.s32.totalorder %s11, 1
      %p66 = por %p64, %p65
      %p67 = scmp.ne.s32.totalorder %s59, %s62
      %p68 = scmp.eq.s32.totalorder %s11, 0
      %p69 = por %p67, %p68
      %p70 = scmp.ne.s32.totalorder %s59, %s62
      %p71 = scmp.eq.s32.totalorder %s16, 1
      %p72 = por %p70, %p71
      %p73 = scmp.ne.s32.totalorder %s62, %s63
      %p74 = scmp.eq.s32.totalorder %s16, 0
      %p75 = por %p73, %p74
      %p76 = scmp.ne.s32.totalorder %s62, %s63
      %p77 = scmp.eq.s32.totalorder %s17, 1
      %p78 = por %p76, %p77
      %p80 = scmp.ne.s32.totalorder %s63, %s79
      %p81 = scmp.eq.s32.totalorder %s17, 0
      %p82 = por %p80, %p81
      %s83 = ssub.s32 %s18, %s30
      %p84 = scmp.eq.s32.totalorder %s83, 0
      %s86 = sadd.s32 %s85, 1
      %s87 = scalar_select %p84, %s85, %s86
      %p90 = pneg %p84
      %p91 = scmp.eq.s32.totalorder %s11, 1
      %p92 = por %p90, %p91
      %p93 = scmp.ne.s32.totalorder %s85, %s88
      %p94 = scmp.eq.s32.totalorder %s11, 0
      %p95 = por %p93, %p94
      %p96 = scmp.ne.s32.totalorder %s85, %s88
      %p97 = scmp.eq.s32.totalorder %s16, 1
      %p98 = por %p96, %p97
      %p99 = scmp.ne.s32.totalorder %s88, %s89
      %p100 = scmp.eq.s32.totalorder %s16, 0
      %p101 = por %p99, %p100
      %p102 = scmp.ne.s32.totalorder %s88, %s89
      %p103 = scmp.eq.s32.totalorder %s17, 1
      %p104 = por %p102, %p103
      %p106 = scmp.ne.s32.totalorder %s89, %s105
      %p107 = scmp.eq.s32.totalorder %s17, 0
      %p108 = por %p106, %p107
      %s109 = ssub.s32 %s18, %s30
      %s110 = ssub.s32 %s19, %s26
      %s111 = sor.u32 %s109, %s110
      %p112 = scmp.eq.s32.totalorder %s111, 0
      %s114 = sadd.s32 %s113, 1
      %s115 = scalar_select %p112, %s113, %s114
      %p118 = pneg %p112
      %p119 = scmp.eq.s32.totalorder %s11, 1
      %p120 = por %p118, %p119
      %p121 = scmp.ne.s32.totalorder %s113, %s116
      %p122 = scmp.eq.s32.totalorder %s11, 0
      %p123 = por %p121, %p122
      %p124 = scmp.ne.s32.totalorder %s113, %s116
      %p125 = scmp.eq.s32.totalorder %s16, 1
      %p126 = por %p124, %p125
      %p127 = scmp.ne.s32.totalorder %s116, %s117
      %p128 = scmp.eq.s32.totalorder %s16, 0
      %p129 = por %p127, %p128
      %p130 = scmp.ne.s32.totalorder %s116, %s117
      %p131 = scmp.eq.s32.totalorder %s17, 1
      %p132 = por %p130, %p131
      %p134 = scmp.ne.s32.totalorder %s117, %s133
      %p135 = scmp.eq.s32.totalorder %s17, 0
      %p136 = por %p134, %p135
      %s138 = sadd.s32 %s137, 1
      %p141 = scmp.eq.s32.totalorder %s11, 1
      %p142 = scmp.ne.s32.totalorder %s137, %s139
      %p143 = scmp.eq.s32.totalorder %s11, 0
      %p144 = por %p142, %p143
      %p145 = scmp.ne.s32.totalorder %s137, %s139
      %p146 = scmp.eq.s32.totalorder %s16, 1
      %p147 = por %p145, %p146
      %p148 = scmp.ne.s32.totalorder %s139, %s140
      %p149 = scmp.eq.s32.totalorder %s16, 0
      %p150 = por %p148, %p149
      %p151 = scmp.ne.s32.totalorder %s139, %s140
      %p152 = scmp.eq.s32.totalorder %s17, 1
      %p153 = por %p151, %p152
      %p155 = scmp.ne.s32.totalorder %s140, %s154
      %p156 = scmp.eq.s32.totalorder %s17, 0
      %p157 = por %p155, %p156
      %p158 = scmp.le.s32.totalorder 1, %s11
      %p159 = scmp.lt.s32.totalorder %s11, 3
      %p160 = pnand %p158, %p159
      %p161 = pneg %p160
      // Predicated region
      $region9: #{reg_weighted_l1_loss.1} parent=5 // pred_check
        _
      $region10: #{reg_weighted_l1_loss.1} parent=5 // pred_check_branch
        %163 = sbr.rel (%p160) target = $region12
      $region11: #{reg_weighted_l1_loss.1} parent=5 // pred_region
        %s164 = ssub.s32 %s11, 1
      $region12: #{reg_weighted_l1_loss.1} parent=5 // pred_fallthru
        _
      %p165 = scmp.lt.s32.totalorder %s11, 2
      // Predicated region
      $region13: #{reg_weighted_l1_loss.1} parent=5 // pred_check
        %p166 = pneg %p165
      $region14: #{reg_weighted_l1_loss.1} parent=5 // pred_check_branch
        %168 = sbr.rel (%p166) target = $region16
      $region15: #{reg_weighted_l1_loss.1} parent=5 // pred_region
        // Predicated region
        $region17: #{reg_weighted_l1_loss.1} parent=15 // pred_check
          %p169 = pneg %p43
        $region18: #{reg_weighted_l1_loss.1} parent=15 // pred_check_branch
          %171 = sbr.rel (%p169) target = $region20
        $region19: #{reg_weighted_l1_loss.1} parent=15 // pred_region
          %p172 = scmp.lt.s32.totalorder %s18, 1
          %s173 = scalar_select %p172, %s18, 1
          %s174 = scalar_lea.vmem %s0, %s173
        $region20: #{reg_weighted_l1_loss.1} parent=15 // pred_fallthru
          _
        // Predicated region
        $region21: #{reg_weighted_l1_loss.1} parent=15 // pred_check
          %p175 = pneg %p69
        $region22: #{reg_weighted_l1_loss.1} parent=15 // pred_check_branch
          %177 = sbr.rel (%p175) target = $region24
        $region23: #{reg_weighted_l1_loss.1} parent=15 // pred_region
          %p178 = scmp.lt.s32.totalorder %s18, 1
          %s179 = scalar_select %p178, %s18, 1
          %s180 = smul.addr %s179, 8
          %s181 = scalar_lea.vmem %s1, %s180
        $region24: #{reg_weighted_l1_loss.1} parent=15 // pred_fallthru
          _
        // Predicated region
        $region25: #{reg_weighted_l1_loss.1} parent=15 // pred_check
          %p182 = pneg %p95
        $region26: #{reg_weighted_l1_loss.1} parent=15 // pred_check_branch
          %184 = sbr.rel (%p182) target = $region28
        $region27: #{reg_weighted_l1_loss.1} parent=15 // pred_region
          %p185 = scmp.lt.s32.totalorder %s18, 1
          %s186 = scalar_select %p185, %s18, 1
          %s187 = smul.addr %s186, 8
          %s188 = scalar_lea.vmem %s2, %s187
        $region28: #{reg_weighted_l1_loss.1} parent=15 // pred_fallthru
          _
        // Predicated region
        $region29: #{reg_weighted_l1_loss.1} parent=15 // pred_check
          %p189 = pneg %p123
        $region30: #{reg_weighted_l1_loss.1} parent=15 // pred_check_branch
          %191 = sbr.rel (%p189) target = $region32
        $region31: #{reg_weighted_l1_loss.1} parent=15 // pred_region
          %s192 = smul.u32 2, %s19
          %p193 = scmp.lt.s32.totalorder %s18, 1
          %s194 = scalar_select %p193, %s18, 1
          %p195 = scmp.lt.s32.totalorder %s192, 1
          %s196 = scalar_select %p195, %s192, 1
          %s197 = smul.addr %s194, 2
          %s198 = sadd.s32 %s196, %s197
          %s199 = smul.addr %s198, 4
          %s200 = scalar_lea.vmem %s3, %s199
          %s201 = smul.u32 2, %s19
        $region32: #{reg_weighted_l1_loss.1} parent=15 // pred_fallthru
          _
      $region16: #{reg_weighted_l1_loss.1} parent=5 // pred_fallthru
        _
      %p202 = scmp.le.s32.totalorder 1, %s11
      %p203 = scmp.lt.s32.totalorder %s11, 3
      %p204 = pnand %p202, %p203
      %p205 = pneg %p204
      // Predicated region
      $region33: #{reg_weighted_l1_loss.1} parent=5 // pred_check
        _
      $region34: #{reg_weighted_l1_loss.1} parent=5 // pred_check_branch
        %207 = sbr.rel (%p204) target = $region36
      $region35: #{reg_weighted_l1_loss.1} parent=5 // pred_region
        %s208 = ssub.s32 %s11, 1
        %p209 = scmp.lt.s32.totalorder %s20, 1
        %s210 = scalar_select %p209, %s20, 1
        %s211 = scalar_lea.vmem %s0, %s210
        %p212 = pneg %p49
        %p213 = pneg %p46
        %p214 = scmp.lt.s32.totalorder %s20, 1
        %s215 = scalar_select %p214, %s20, 1
        %s216 = smul.addr %s215, 8
        %s217 = scalar_lea.vmem %s1, %s216
        %p218 = pneg %p75
        %p219 = pneg %p72
        %p220 = scmp.lt.s32.totalorder %s20, 1
        %s221 = scalar_select %p220, %s20, 1
        %s222 = smul.addr %s221, 8
        %s223 = scalar_lea.vmem %s2, %s222
        %p224 = pneg %p101
        %p225 = pneg %p98
        %s226 = smul.u32 2, %s21
        %p227 = scmp.lt.s32.totalorder %s20, 1
        %s228 = scalar_select %p227, %s20, 1
        %p229 = scmp.lt.s32.totalorder %s226, 1
        %s230 = scalar_select %p229, %s226, 1
        %s231 = smul.addr %s228, 2
        %s232 = sadd.s32 %s230, %s231
        %s233 = smul.addr %s232, 4
        %s234 = scalar_lea.vmem %s3, %s233
        %p235 = pneg %p129
        %p236 = pneg %p126
        %p237 = pneg %p150
        %p238 = pneg %p147
        %p239 = scmp.lt.s32.totalorder %s20, 1
        %s240 = scalar_select %p239, %s20, 1
        %s241 = scalar_lea.vmem %s0, %s240
        %p242 = scmp.lt.s32.totalorder %s20, 1
        %s243 = scalar_select %p242, %s20, 1
        %s244 = smul.addr %s243, 8
        %s245 = scalar_lea.vmem %s1, %s244
        %p246 = scmp.lt.s32.totalorder %s20, 1
        %s247 = scalar_select %p246, %s20, 1
        %s248 = smul.addr %s247, 8
        %s249 = scalar_lea.vmem %s2, %s248
        %s250 = smul.u32 2, %s21
        %p251 = scmp.lt.s32.totalorder %s20, 1
        %s252 = scalar_select %p251, %s20, 1
        %p253 = scmp.lt.s32.totalorder %s250, 1
        %s254 = scalar_select %p253, %s250, 1
        %s255 = smul.addr %s252, 2
        %s256 = sadd.s32 %s254, %s255
        %s257 = smul.addr %s256, 4
        %s258 = scalar_lea.vmem %s3, %s257
        %s259 = smul.u32 2, %s21
        %p260 = scmp.eq.s32.totalorder %s20, 0
        %p261 = scmp.eq.s32.totalorder %s21, 0
        %p262 = pnand %p260, %p261
        %p263 = pneg %p262
        // Predicated region
        $region37: #{reg_weighted_l1_loss.1} parent=35 // pred_check
          _
        $region38: #{reg_weighted_l1_loss.1} parent=35 // pred_check_branch
          %265 = sbr.rel (%p262) target = $region40
        $region39: #{reg_weighted_l1_loss.1} parent=35 // pred_region
          %s266 = scalar_lea.smem [#allocation3], 0
          %267 = sst [smem:[%s266]] 0.0
          %s268 = scalar_lea.smem [#allocation3], 1
          %269 = sst [smem:[%s268]] 0.0
        $region40: #{reg_weighted_l1_loss.1} parent=35 // pred_fallthru
          _
        // Predicated region
        $region41: #{reg_weighted_l1_loss.1} parent=35 // pred_check
          %p270 = pneg %p261
        $region42: #{reg_weighted_l1_loss.1} parent=35 // pred_check_branch
          %272 = sbr.rel (%p270) target = $region44
        $region43: #{reg_weighted_l1_loss.1} parent=35 // pred_region
          %vm273 = vcmask 60416
          %274 = vst.msk [vmem:[#allocation2] sm:$0xf] %vm273, 0.0
        $region44: #{reg_weighted_l1_loss.1} parent=35 // pred_fallthru
          _
        %v275 = vld [vmem:[%s258] sm:$0xff]
        %v276 = vld [vmem:[%s241] sm:$0x1]
        %v277 = vlaneseq
        %v278 = vshrl.u32 %v277, 7
        %v279 = vadd.s32 %v278, 8
        %v280 = vadd.s32 %v278, 16
        %v281 = vadd.s32 %v278, 24
        %v282 = vadd.s32 %v278, 32
        %v283 = vadd.s32 %v278, 40
        %v284 = vadd.s32 %v278, 48
        %v285 = vadd.s32 %v278, 56
        %v286 = vadd.s32 %v278, 64
        %v287 = vadd.s32 %v278, 72
        %v288 = vadd.s32 %v278, 80
        %v289 = vadd.s32 %v278, 88
        %v290 = vadd.s32 %v278, 96
        %v291 = vadd.s32 %v278, 104
        %v292 = vadd.s32 %v278, 112
        %v293 = vadd.s32 %v278, 120
        %v294 = vadd.s32 %v278, 128
        %v295 = vadd.s32 %v278, 136
        %v296 = vadd.s32 %v278, 144
        %v297 = vadd.s32 %v278, 152
        %v298 = vadd.s32 %v278, 160
        %v299 = vadd.s32 %v278, 168
        %v300 = vadd.s32 %v278, 176
        %v301 = vadd.s32 %v278, 184
        %v302 = vadd.s32 %v278, 192
        %v303 = vadd.s32 %v278, 200
        %v304 = vadd.s32 %v278, 208
        %v305 = vadd.s32 %v278, 216
        %v306 = vadd.s32 %v278, 224
        %v307 = vadd.s32 %v278, 232
        %v308 = vadd.s32 %v278, 240
        %v309 = vadd.s32 %v278, 248
        %s310 = smul.u32 %s21, 256
        %v311 = vstv %s310
        %v312 = vadd.s32 %v278, %v311
        %v313 = vadd.s32 %v279, %v311
        %v314 = vadd.s32 %v280, %v311
        %v315 = vadd.s32 %v281, %v311
        %v316 = vadd.s32 %v282, %v311
        %v317 = vadd.s32 %v283, %v311
        %v318 = vadd.s32 %v284, %v311
        %v319 = vadd.s32 %v285, %v311
        %v320 = vadd.s32 %v286, %v311
        %v321 = vadd.s32 %v287, %v311
        %v322 = vadd.s32 %v288, %v311
        %v323 = vadd.s32 %v289, %v311
        %v324 = vadd.s32 %v290, %v311
        %v325 = vadd.s32 %v291, %v311
        %v326 = vadd.s32 %v292, %v311
        %v327 = vadd.s32 %v293, %v311
        %v328 = vadd.s32 %v294, %v311
        %v329 = vadd.s32 %v295, %v311
        %v330 = vadd.s32 %v296, %v311
        %v331 = vadd.s32 %v297, %v311
        %v332 = vadd.s32 %v298, %v311
        %v333 = vadd.s32 %v299, %v311
        %v334 = vadd.s32 %v300, %v311
        %v335 = vadd.s32 %v301, %v311
        %v336 = vadd.s32 %v302, %v311
        %v337 = vadd.s32 %v303, %v311
        %v338 = vadd.s32 %v304, %v311
        %v339 = vadd.s32 %v305, %v311
        %v340 = vadd.s32 %v306, %v311
        %v341 = vadd.s32 %v307, %v311
        %v342 = vadd.s32 %v308, %v311
        %v343 = vadd.s32 %v309, %v311
        %v344 = vlaneseq
        %v345 = vshrl.u32 %v344, 7
        %v346 = vsub.s32 0, %v345
        %v347 = vrot.slane %v276, %v346
        %vm348 = vcmp.eq.s32.totalorder %v312, %v347
        %vm349 = vcmp.eq.s32.totalorder %v313, %v347
        %vm350 = vcmp.eq.s32.totalorder %v314, %v347
        %vm351 = vcmp.eq.s32.totalorder %v315, %v347
        %vm352 = vcmp.eq.s32.totalorder %v316, %v347
        %vm353 = vcmp.eq.s32.totalorder %v317, %v347
        %vm354 = vcmp.eq.s32.totalorder %v318, %v347
        %vm355 = vcmp.eq.s32.totalorder %v319, %v347
        %vm356 = vcmp.eq.s32.totalorder %v320, %v347
        %vm357 = vcmp.eq.s32.totalorder %v321, %v347
        %vm358 = vcmp.eq.s32.totalorder %v322, %v347
        %vm359 = vcmp.eq.s32.totalorder %v323, %v347
        %vm360 = vcmp.eq.s32.totalorder %v324, %v347
        %vm361 = vcmp.eq.s32.totalorder %v325, %v347
        %vm362 = vcmp.eq.s32.totalorder %v326, %v347
        %vm363 = vcmp.eq.s32.totalorder %v327, %v347
        %vm364 = vcmp.eq.s32.totalorder %v328, %v347
        %vm365 = vcmp.eq.s32.totalorder %v329, %v347
        %vm366 = vcmp.eq.s32.totalorder %v330, %v347
        %vm367 = vcmp.eq.s32.totalorder %v331, %v347
        %vm368 = vcmp.eq.s32.totalorder %v332, %v347
        %vm369 = vcmp.eq.s32.totalorder %v333, %v347
        %vm370 = vcmp.eq.s32.totalorder %v334, %v347
        %vm371 = vcmp.eq.s32.totalorder %v335, %v347
        %vm372 = vcmp.eq.s32.totalorder %v336, %v347
        %vm373 = vcmp.eq.s32.totalorder %v337, %v347
        %vm374 = vcmp.eq.s32.totalorder %v338, %v347
        %vm375 = vcmp.eq.s32.totalorder %v339, %v347
        %vm376 = vcmp.eq.s32.totalorder %v340, %v347
        %vm377 = vcmp.eq.s32.totalorder %v341, %v347
        %vm378 = vcmp.eq.s32.totalorder %v342, %v347
        %vm379 = vcmp.eq.s32.totalorder %v343, %v347
        %v380 = vsel %vm348, 1, 0
        %v381 = vsel %vm349, 1, 0
        %v382 = vsel %vm350, 1, 0
        %v383 = vsel %vm351, 1, 0
        %v384 = vsel %vm352, 1, 0
        %v385 = vsel %vm353, 1, 0
        %v386 = vsel %vm354, 1, 0
        %v387 = vsel %vm355, 1, 0
        %v388 = vsel %vm356, 1, 0
        %v389 = vsel %vm357, 1, 0
        %v390 = vsel %vm358, 1, 0
        %v391 = vsel %vm359, 1, 0
        %v392 = vsel %vm360, 1, 0
        %v393 = vsel %vm361, 1, 0
        %v394 = vsel %vm362, 1, 0
        %v395 = vsel %vm363, 1, 0
        %v396 = vsel %vm364, 1, 0
        %v397 = vsel %vm365, 1, 0
        %v398 = vsel %vm366, 1, 0
        %v399 = vsel %vm367, 1, 0
        %v400 = vsel %vm368, 1, 0
        %v401 = vsel %vm369, 1, 0
        %v402 = vsel %vm370, 1, 0
        %v403 = vsel %vm371, 1, 0
        %v404 = vsel %vm372, 1, 0
        %v405 = vsel %vm373, 1, 0
        %v406 = vsel %vm374, 1, 0
        %v407 = vsel %vm375, 1, 0
        %v408 = vsel %vm376, 1, 0
        %v409 = vsel %vm377, 1, 0
        %v410 = vsel %vm378, 1, 0
        %v411 = vsel %vm379, 1, 0
        %v412 = vcvt.s32.f32 %v380
        %v413 = vcvt.s32.f32 %v381
        %v414 = vcvt.s32.f32 %v382
        %v415 = vcvt.s32.f32 %v383
        %v416 = vcvt.s32.f32 %v384
        %v417 = vcvt.s32.f32 %v385
        %v418 = vcvt.s32.f32 %v386
        %v419 = vcvt.s32.f32 %v387
        %v420 = vcvt.s32.f32 %v388
        %v421 = vcvt.s32.f32 %v389
        %v422 = vcvt.s32.f32 %v390
        %v423 = vcvt.s32.f32 %v391
        %v424 = vcvt.s32.f32 %v392
        %v425 = vcvt.s32.f32 %v393
        %v426 = vcvt.s32.f32 %v394
        %v427 = vcvt.s32.f32 %v395
        %v428 = vcvt.s32.f32 %v396
        %v429 = vcvt.s32.f32 %v397
        %v430 = vcvt.s32.f32 %v398
        %v431 = vcvt.s32.f32 %v399
        %v432 = vcvt.s32.f32 %v400
        %v433 = vcvt.s32.f32 %v401
        %v434 = vcvt.s32.f32 %v402
        %v435 = vcvt.s32.f32 %v403
        %v436 = vcvt.s32.f32 %v404
        %v437 = vcvt.s32.f32 %v405
        %v438 = vcvt.s32.f32 %v406
        %v439 = vcvt.s32.f32 %v407
        %v440 = vcvt.s32.f32 %v408
        %v441 = vcvt.s32.f32 %v409
        %v442 = vcvt.s32.f32 %v410
        %v443 = vcvt.s32.f32 %v411
        %v444 = vld [vmem:[#allocation2] sm:$0xf]
        %v446 = vcombine.high %v275, %v275
        %448 = vmatprep.subr.mxu0 0.0
        %449 = vmatpush1.msra.mxu0 %v427
        %450 = vmatprep.subr.mxu0 0.0
        %451 = vmatpush1.msra.mxu0 %v426
        %452 = vmatprep.subr.mxu0 0.0
        %453 = vmatpush1.msra.mxu0 %v425
        %454 = vmatprep.subr.mxu0 0.0
        %455 = vmatpush1.msra.mxu0 %v424
        %456 = vmatprep.subr.mxu0 0.0
        %457 = vmatpush1.msra.mxu0 %v423
        %458 = vmatprep.subr.mxu0 0.0
        %459 = vmatpush1.msra.mxu0 %v422
        %460 = vmatprep.subr.mxu0 0.0
        %461 = vmatpush1.msra.mxu0 %v421
        %462 = vmatprep.subr.mxu0 0.0
        %463 = vmatpush1.msra.mxu0 %v420
        %464 = vmatprep.subr.mxu0 0.0
        %465 = vmatpush1.msra.mxu0 %v419
        %466 = vmatprep.subr.mxu0 0.0
        %467 = vmatpush1.msra.mxu0 %v418
        %468 = vmatprep.subr.mxu0 0.0
        %469 = vmatpush1.msra.mxu0 %v417
        %470 = vmatprep.subr.mxu0 0.0
        %471 = vmatpush1.msra.mxu0 %v416
        %472 = vmatprep.subr.mxu0 0.0
        %473 = vmatpush1.msra.mxu0 %v415
        %474 = vmatprep.subr.mxu0 0.0
        %475 = vmatpush1.msra.mxu0 %v414
        %476 = vmatprep.subr.mxu0 0.0
        %477 = vmatpush1.msra.mxu0 %v413
        %478 = vmatprep.subr.mxu0 0.0
        %479 = vmatpush1.msra.mxu0 %v412
        %480 = vmatprep.subr.mxu0 0.0
        %481 = vmatpush2.msra.mxu0 %v443
        %482 = vmatprep.subr.mxu0 0.0
        %483 = vmatpush2.msra.mxu0 %v442
        %484 = vmatprep.subr.mxu0 0.0
        %485 = vmatpush2.msra.mxu0 %v441
        %486 = vmatprep.subr.mxu0 0.0
        %487 = vmatpush2.msra.mxu0 %v440
        %488 = vmatprep.subr.mxu0 0.0
        %489 = vmatpush2.msra.mxu0 %v439
        %490 = vmatprep.subr.mxu0 0.0
        %491 = vmatpush2.msra.mxu0 %v438
        %492 = vmatprep.subr.mxu0 0.0
        %493 = vmatpush2.msra.mxu0 %v437
        %494 = vmatprep.subr.mxu0 0.0
        %495 = vmatpush2.msra.mxu0 %v436
        %496 = vmatprep.subr.mxu0 0.0
        %497 = vmatpush2.msra.mxu0 %v435
        %498 = vmatprep.subr.mxu0 0.0
        %499 = vmatpush2.msra.mxu0 %v434
        %500 = vmatprep.subr.mxu0 0.0
        %501 = vmatpush2.msra.mxu0 %v433
        %502 = vmatprep.subr.mxu0 0.0
        %503 = vmatpush2.msra.mxu0 %v432
        %504 = vmatprep.subr.mxu0 0.0
        %505 = vmatpush2.msra.mxu0 %v431
        %506 = vmatprep.subr.mxu0 0.0
        %507 = vmatpush2.msra.mxu0 %v430
        %508 = vmatprep.subr.mxu0 0.0
        %509 = vmatpush2.msra.mxu0 %v429
        %510 = vmatprep.subr.mxu0 0.0
        %511 = vmatpush2.msra.mxu0 %v428
        %512 = vmatprep.mubr.f32.mxu0 %v446
        %513 = vmatmul.mubr.f32.gmra.mxu0 %v275
        %v514 = vpop.f32.mrf.mxu0
        %v515 = vadd.f32 0.0, %v514
        %v516 = vpop.f32.mrf.mxu0
        %517 = vdwg.mxu0
        %v518 = vadd.f32 %v444, %v515
        %vm519 = vcmask 60416
        %520 = vst.msk [vmem:[#allocation2] sm:$0xf] %vm519, %v518
        // Predicated region
        $region45: #{reg_weighted_l1_loss.1} parent=35 // pred_check
          %p521 = pneg %p261
        $region46: #{reg_weighted_l1_loss.1} parent=35 // pred_check_branch
          %523 = sbr.rel (%p521) target = $region48
        $region47: #{reg_weighted_l1_loss.1} parent=35 // pred_region
          %v524 = vld [vmem:[#allocation2] sm:$0xf]
          %525 = vxpose.xlu0.b32.start [1/16] %v524, 128
          %526 = vxpose.xlu0.b32.cont [2/16] 0.0, 128
          %527 = vxpose.xlu0.b32.cont [3/16] 0.0, 128
          %528 = vxpose.xlu0.b32.cont [4/16] 0.0, 128
          %529 = vxpose.xlu0.b32.cont [5/16] 0.0, 128
          %530 = vxpose.xlu0.b32.cont [6/16] 0.0, 128
          %531 = vxpose.xlu0.b32.cont [7/16] 0.0, 128
          %532 = vxpose.xlu0.b32.cont [8/16] 0.0, 128
          %533 = vxpose.xlu0.b32.cont [9/16] 0.0, 128
          %534 = vxpose.xlu0.b32.cont [10/16] 0.0, 128
          %535 = vxpose.xlu0.b32.cont [11/16] 0.0, 128
          %536 = vxpose.xlu0.b32.cont [12/16] 0.0, 128
          %537 = vxpose.xlu0.b32.cont [13/16] 0.0, 128
          %538 = vxpose.xlu0.b32.cont [14/16] 0.0, 128
          %539 = vxpose.xlu0.b32.cont [15/16] 0.0, 128
          %540 = vxpose.xlu0.b32.end [16/16] 0.0, 128
          %v541 = vpop.trf.xlu0
          %v542 = vpop.trf.xlu0
          %v543 = vpop.trf.xlu0
          %v544 = vpop.trf.xlu0
          %v545 = vpop.trf.xlu0
          %v546 = vpop.trf.xlu0
          %v547 = vpop.trf.xlu0
          %v548 = vpop.trf.xlu0
          %v549 = vpop.trf.xlu0
          %v550 = vpop.trf.xlu0
          %v551 = vpop.trf.xlu0
          %v552 = vpop.trf.xlu0
          %v553 = vpop.trf.xlu0
          %v554 = vpop.trf.xlu0
          %v555 = vpop.trf.xlu0
          %v556 = vpop.trf.xlu0
          %v557 = vld [vmem:[%s245] sm:$0xff]
          %v558 = vld [vmem:[%s249] sm:$0xff]
          %s559 = sld [smem:[#allocation3]]
          %v560 = vmul.f32 %v541, %v557
          %v561 = vmul.f32 %v558, %v557
          %v562 = vsub.f32 %v560, %v561
          %v563 = vand.u32 2147483647, %v562
          %vm564 = vcmask 31744
          %v565 = vsel %vm564, %v563, 0.0
          %566 = vadd.xlane.f32.xlu0 %v565
          %v567 = vpop.xlane.xlu0 %566
          %v568 = vrot.slane %v567, 4
          %v569 = vadd.f32 %v567, %v568
          %v570 = vrot.slane %v569, 2
          %v571 = vadd.f32 %v569, %v570
          %v572 = vrot.slane %v571, 1
          %v573 = vadd.f32 %v571, %v572
          %s574 = vtos %v573
          %s575 = sadd.f32 %s559, %s574
          %s576 = scalar_lea.smem [#allocation3], 0
          %577 = sst [smem:[%s576]] %s575
          %s578 = sld [smem:[#allocation3 + $0x1]]
          %v579 = vsel %vm564, %v557, 0.0
          %580 = vadd.xlane.f32.xlu0 %v579
          %v581 = vpop.xlane.xlu0 %580
          %v582 = vrot.slane %v581, 4
          %v583 = vadd.f32 %v581, %v582
          %v584 = vrot.slane %v583, 2
          %v585 = vadd.f32 %v583, %v584
          %v586 = vrot.slane %v585, 1
          %v587 = vadd.f32 %v585, %v586
          %s588 = vtos %v587
          %s589 = sadd.f32 %s578, %s588
          %s590 = scalar_lea.smem [#allocation3], 1
          %591 = sst [smem:[%s590]] %s589
        $region48: #{reg_weighted_l1_loss.1} parent=35 // pred_fallthru
          _
        %p592 = scmp.eq.s32.totalorder %s20, 1
        %p593 = pnand %p261, %p592
        %p594 = pneg %p593
        // Predicated region
        $region49: #{reg_weighted_l1_loss.1} parent=35 // pred_check
          _
        $region50: #{reg_weighted_l1_loss.1} parent=35 // pred_check_branch
          %596 = sbr.rel (%p593) target = $region52
        $region51: #{reg_weighted_l1_loss.1} parent=35 // pred_region
          %s597 = sld [smem:[#allocation3]]
          %s598 = sld [smem:[#allocation3 + $0x1]]
          %s599 = sadd.f32 %s598, 0.0001
          %v600 = vstv %s599
          %v601 = vrcp.pop %v600
          %s602 = vtos %v601
          %s603 = smul.f32 %s597, %s602
          %s604 = scalar_lea.smem [#allocation4], 0
          %605 = sst [smem:[%s604]] %s603
        $region52: #{reg_weighted_l1_loss.1} parent=35 // pred_fallthru
          _
        // Predicated region
        $region53: #{reg_weighted_l1_loss.1} parent=35 // pred_check
          %p606 = pneg %p147
        $region54: #{reg_weighted_l1_loss.1} parent=35 // pred_check_branch
          %608 = sbr.rel (%p606) target = $region56
        $region55: #{reg_weighted_l1_loss.1} parent=35 // pred_region
          %s610 = ssub.s32 16, 16
          %611 = vsyncadd [#allocation5], %s610
          %614 = dma.smem_to_hbm [#allocation4], 16, %s4, [#allocation5]
        $region56: #{reg_weighted_l1_loss.1} parent=35 // pred_fallthru
          _
        // Predicated region
        $region57: #{reg_weighted_l1_loss.1} parent=35 // pred_check
          %p615 = pneg %p147
        $region58: #{reg_weighted_l1_loss.1} parent=35 // pred_check_branch
          %617 = sbr.rel (%p615) target = $region60
        $region59: #{reg_weighted_l1_loss.1} parent=35 // pred_region
          %618 = dma.done [#allocation5], 16
        $region60: #{reg_weighted_l1_loss.1} parent=35 // pred_fallthru
          _
        %619 = sfence
      $region36: #{reg_weighted_l1_loss.1} parent=5 // pred_fallthru
        _
      %p620 = scmp.le.s32.totalorder 2, %s11
      // Predicated region
      $region61: #{reg_weighted_l1_loss.1} parent=5 // pred_check
        %p621 = pneg %p620
      $region62: #{reg_weighted_l1_loss.1} parent=5 // pred_check_branch
        %623 = sbr.rel (%p621) target = $region64
      $region63: #{reg_weighted_l1_loss.1} parent=5 // pred_region
        %s624 = ssub.s32 %s11, 2
      $region64: #{reg_weighted_l1_loss.1} parent=5 // pred_fallthru
        _
    $region6: #{reg_weighted_l1_loss.1} parent=1 // loop_footer
      %s15 = sadd.s32 1, %s11
    $region7: #{reg_weighted_l1_loss.1} parent=1 // loop_footer_branch
      %10 = sbr.rel target = $region3
    $region8: #{reg_weighted_l1_loss.1} parent=1 // loop_exit
      _
    %625 = vsyncpa [#allocation5], 1
    %s626 = scalar_lea.sflag [#allocation5], 1
    %627 = vsyncpa %s626, 1

</llo_original>
